<compile_context>
chip_gen: v7x
topology: tpu7x:2x2x1
jax: 0.10.0
libtpu: 0.0.40
codegen_flags: <defaults>
</compile_context>

<pallas_src>
import jax
import jax.numpy as jnp
from jax import lax
from jax.experimental import pallas as pl
from jax.experimental.pallas import tpu as pltpu


def _split_ranges(L, OL, k, p):
    """Split output positions along one pooled axis into interior / boundary.

    Interior positions are those whose k-window reads only real input
    (no zero padding).  Returns (interior_start, interior_count, boundary_idx).
    """
    t0 = min((p + 1) // 2, OL)           # first fully-interior output index
    t1 = min((L - k + p) // 2, OL - 1)   # last  fully-interior output index
    if t1 < t0:
        return 0, 0, tuple(range(OL))
    boundary = tuple(range(0, t0)) + tuple(range(t1 + 1, OL))
    return t0, t1 - t0 + 1, boundary


def _pick_tc(C, H, W, itemsize, target_bytes=512 * 1024, max_tc=16):
    """Channels per block: enough work per grid step, bounded VMEM / unroll."""
    plane = H * W * itemsize
    want = max(1, min(max_tc, target_bytes // max(plane, 1)))
    tc = 1
    for d in range(1, min(C, want) + 1):
        if C % d == 0:
            tc = d
    return tc


def _make_maxpool_kernel(k, p, H, W, OH, OW, TC):
    """Build the per-block kernel.  All sizes are Python ints closed over."""
    v_i0, v_n, v_bnd = _split_ranges(H, OH, k, p)   # rows (H axis)
    h_i0, h_n, h_bnd = _split_ranges(W, OW, k, p)   # cols (W axis)

    def kernel(x_ref, o_ref, vm_ref, vt_ref, ot_ref):
        # x_ref : (TC, H,  W)    input block        (H on sublanes, W on lanes)
        # o_ref : (TC, OH, OW)   output block
        # vm_ref: (TC, OH, W)    vertical window-max intermediate       (VMEM)
        # vt_ref: (TC, W,  OH)   vm transposed (W on sublanes)          (VMEM)
        # ot_ref: (TC, OW, OH)   pooled result, transposed orientation  (VMEM)

        # ---- vertical pass: vm[c, oh, w] = max_i xp[c, 2*oh + i, w] --------
        # Interior rows: every tap reads a real input row (no padding).
        if v_n > 0:
            s0 = 2 * v_i0 - p
            acc = x_ref[:, pl.ds(s0, v_n, 2), :]
            for i in range(1, k):
                acc = jnp.maximum(acc, x_ref[:, pl.ds(s0 + i, v_n, 2), :])
            vm_ref[:, v_i0:v_i0 + v_n, :] = acc
        # Boundary rows: window overlaps the zero padding -> include 0.
        for oh in v_bnd:
            r_lo = max(0, 2 * oh - p)
            r_hi = min(H - 1, 2 * oh - p + k - 1)
            acc = x_ref[:, r_lo:r_lo + 1, :]
            for r in range(r_lo + 1, r_hi + 1):
                acc = jnp.maximum(acc, x_ref[:, r:r + 1, :])
            vm_ref[:, oh:oh + 1, :] = jnp.maximum(acc, 0.0)

        # ---- relayout: put W on the sublane axis (XLU is idle here) --------
        for c in range(TC):
            vt_ref[c] = vm_ref[c].T                      # (OH, W) -> (W, OH)

        # ---- horizontal pass: out[c, oh, ow] = max_j vm_p[c, oh, 2*ow + j] -
        if h_n > 0:
            s0 = 2 * h_i0 - p
            acc = vt_ref[:, pl.ds(s0, h_n, 2), :]
            for j in range(1, k):
                acc = jnp.maximum(acc, vt_ref[:, pl.ds(s0 + j, h_n, 2), :])
            ot_ref[:, h_i0:h_i0 + h_n, :] = acc
        for ow in h_bnd:
            c_lo = max(0, 2 * ow - p)
            c_hi = min(W - 1, 2 * ow - p + k - 1)
            acc = vt_ref[:, c_lo:c_lo + 1, :]
            for cc in range(c_lo + 1, c_hi + 1):
                acc = jnp.maximum(acc, vt_ref[:, cc:cc + 1, :])
            ot_ref[:, ow:ow + 1, :] = jnp.maximum(acc, 0.0)

        # ---- relayout back and write the output densely ---------------------
        for c in range(TC):
            o_ref[c] = ot_ref[c].T                       # (OW, OH) -> (OH, OW)

    return kernel


def maxpool_forward(x_nchw, kernel_size):
    """F.max_pool2d(F.pad(x, (p,)*4), kernel_size, stride=2), p=(k-1)//2."""
    k = int(kernel_size)
    p = (k - 1) // 2
    N, C, H, W = x_nchw.shape
    OH = (H + 2 * p - k) // 2 + 1
    OW = (W + 2 * p - k) // 2 + 1

    itemsize = jnp.dtype(x_nchw.dtype).itemsize
    TC = _pick_tc(C, H, W, itemsize)
    grid = (N, C // TC)

    # VMEM budget: double-buffered in/out blocks + the three scratches.
    blk_in = TC * H * W * itemsize
    blk_out = TC * OH * OW * itemsize
    scratch = TC * (OH * W + W * OH + OW * OH) * itemsize
    need = 2 * blk_in + 2 * blk_out + scratch
    vmem_limit = int(min(64 * 2**20, max(32 * 2**20, 2 * need)))

    out_bytes = N * C * OH * OW * itemsize
    in_bytes = x_nchw.size * itemsize

    out = pl.pallas_call(
        _make_maxpool_kernel(k, p, H, W, OH, OW, TC),
        out_shape=jax.ShapeDtypeStruct((N, C, OH, OW), x_nchw.dtype),
        grid_spec=pltpu.PrefetchScalarGridSpec(
            num_scalar_prefetch=0,
            grid=grid,
            in_specs=[pl.BlockSpec((None, TC, H, W),
                                   lambda n, c: (n, c, 0, 0))],
            out_specs=pl.BlockSpec((None, TC, OH, OW),
                                   lambda n, c: (n, c, 0, 0)),
            scratch_shapes=[
                pltpu.VMEM((TC, OH, W), x_nchw.dtype),
                pltpu.VMEM((TC, W, OH), x_nchw.dtype),
                pltpu.VMEM((TC, OW, OH), x_nchw.dtype),
            ],
        ),
        compiler_params=pltpu.CompilerParams(
            dimension_semantics=("parallel", "parallel"),
            vmem_limit_bytes=vmem_limit),
        cost_estimate=pl.CostEstimate(
            flops=N * C * OH * OW * k * k,
            transcendentals=0,
            bytes_accessed=in_bytes + out_bytes),
    )(x_nchw)

    return out


class MaxPool:
    """Mirror of the PyTorch `maxpool` module."""

    def __init__(self, kernel_size):
        self.kernel_size = kernel_size

    def __call__(self, x):
        return maxpool_forward(x, self.kernel_size)


def _maxpool_reference(x_nchw, kernel_size):
    """Pure-JAX/XLA reference with identical semantics (for validation)."""
    k = int(kernel_size)
    p = (k - 1) // 2
    xp = jnp.pad(x_nchw, ((0, 0), (0, 0), (p, p), (p, p)))   # zero pad (F.pad)
    return lax.reduce_window(xp, -jnp.inf, lax.max,
                             (1, 1, k, k), (1, 1, 2, 2), "VALID")


if __name__ == "__main__":
    key = jax.random.PRNGKey(0)
    kernel_size = 3                       # as used in depthnet: maxpool(3)
    N, C, H, W = 2, 4, 16, 16
    x = jax.random.normal(key, (N, C, H, W), jnp.float32)

    pool = MaxPool(kernel_size)
    fwd = jax.jit(pool.__call__)
    y = fwd(x)
    jax.block_until_ready(y)

    assert y.shape == (N, C, H // 2, W // 2), y.shape

    y_ref = _maxpool_reference(x, kernel_size)
    assert jnp.allclose(y, y_ref), float(jnp.max(jnp.abs(y - y_ref)))

    print("KERNEL_OK")
</pallas_src>

<mosaic_0001>
module attributes {stable_mosaic.version = 11 : i64} {
  func.func @kernel(%arg0: i32, %arg1: i32, %arg2: memref<1x4x16x16xf32, #tpu.memory_space<vmem>>, %arg3: memref<1x4x8x8xf32, #tpu.memory_space<vmem>>, %arg4: memref<4x8x16xf32, #tpu.memory_space<vmem>>, %arg5: memref<4x16x8xf32, #tpu.memory_space<vmem>>, %arg6: memref<4x8x8xf32, #tpu.memory_space<vmem>>) attributes {dimension_semantics = [#tpu.dimension_semantics<parallel>, #tpu.dimension_semantics<parallel>], iteration_bounds = array<i64: 2, 1>, scalar_prefetch = 0 : i64, scratch_operands = 3 : i64, tpu.core_type = #tpu.core_type<tc>, window_params = [{transform_indices = @transform_0, window_bounds = array<i64: 1, 4, 16, 16>}, {transform_indices = @transform_1, window_bounds = array<i64: 1, 4, 8, 8>}]} {
    %c0 = arith.constant 0 : index
    %c0_0 = arith.constant 0 : index
    %c1 = arith.constant 1 : index
    %c0_1 = arith.constant 0 : index
    %0 = tpu.strided_load %arg2[%c0, %c0_0, %c1, %c0_1] {strides = array<i32: 1, 1, 2, 1>} : memref<1x4x16x16xf32, #tpu.memory_space<vmem>>, vector<1x4x7x16xf32>
    %1 = vector.shape_cast %0 : vector<1x4x7x16xf32> to vector<4x7x16xf32>
    %c0_2 = arith.constant 0 : index
    %c0_3 = arith.constant 0 : index
    %c2 = arith.constant 2 : index
    %c0_4 = arith.constant 0 : index
    %2 = tpu.strided_load %arg2[%c0_2, %c0_3, %c2, %c0_4] {strides = array<i32: 1, 1, 2, 1>} : memref<1x4x16x16xf32, #tpu.memory_space<vmem>>, vector<1x4x7x16xf32>
    %3 = vector.shape_cast %2 : vector<1x4x7x16xf32> to vector<4x7x16xf32>
    %4 = arith.maximumf %1, %3 : vector<4x7x16xf32>
    %c0_5 = arith.constant 0 : index
    %c0_6 = arith.constant 0 : index
    %c3 = arith.constant 3 : index
    %c0_7 = arith.constant 0 : index
    %5 = tpu.strided_load %arg2[%c0_5, %c0_6, %c3, %c0_7] {strides = array<i32: 1, 1, 2, 1>} : memref<1x4x16x16xf32, #tpu.memory_space<vmem>>, vector<1x4x7x16xf32>
    %6 = vector.shape_cast %5 : vector<1x4x7x16xf32> to vector<4x7x16xf32>
    %7 = arith.maximumf %4, %6 : vector<4x7x16xf32>
    %c0_8 = arith.constant 0 : index
    %c1_9 = arith.constant 1 : index
    %c0_10 = arith.constant 0 : index
    %8 = vector.load %arg4[%c0_8, %c1_9, %c0_10] : memref<4x8x16xf32, #tpu.memory_space<vmem>>, vector<4x7x16xf32>
    tpu.vector_store %arg4[%c0_8, %c1_9, %c0_10], %7 {strides = array<i32>} : memref<4x8x16xf32, #tpu.memory_space<vmem>>, vector<4x7x16xf32>,
    %c0_11 = arith.constant 0 : index
    %c0_12 = arith.constant 0 : index
    %c0_13 = arith.constant 0 : index
    %c0_14 = arith.constant 0 : index
    %9 = vector.load %arg2[%c0_11, %c0_12, %c0_13, %c0_14] : memref<1x4x16x16xf32, #tpu.memory_space<vmem>>, vector<1x4x1x16xf32>
    %10 = vector.shape_cast %9 : vector<1x4x1x16xf32> to vector<4x1x16xf32>
    %c0_15 = arith.constant 0 : index
    %c0_16 = arith.constant 0 : index
    %c1_17 = arith.constant 1 : index
    %c0_18 = arith.constant 0 : index
    %11 = vector.load %arg2[%c0_15, %c0_16, %c1_17, %c0_18] : memref<1x4x16x16xf32, #tpu.memory_space<vmem>>, vector<1x4x1x16xf32>
    %12 = vector.shape_cast %11 : vector<1x4x1x16xf32> to vector<4x1x16xf32>
    %13 = arith.maximumf %10, %12 : vector<4x1x16xf32>
    %cst = arith.constant 0.000000e+00 : f32
    %14 = vector.broadcast %cst : f32 to vector<4x1x16xf32>
    %15 = arith.maximumf %13, %14 : vector<4x1x16xf32>
    %c0_19 = arith.constant 0 : index
    %c0_20 = arith.constant 0 : index
    %c0_21 = arith.constant 0 : index
    %16 = vector.load %arg4[%c0_19, %c0_20, %c0_21] : memref<4x8x16xf32, #tpu.memory_space<vmem>>, vector<4x1x16xf32>
    tpu.vector_store %arg4[%c0_19, %c0_20, %c0_21], %15 {strides = array<i32>} : memref<4x8x16xf32, #tpu.memory_space<vmem>>, vector<4x1x16xf32>,
    %c0_22 = arith.constant 0 : index
    %c0_23 = arith.constant 0 : index
    %c0_24 = arith.constant 0 : index
    %17 = vector.load %arg4[%c0_22, %c0_23, %c0_24] : memref<4x8x16xf32, #tpu.memory_space<vmem>>, vector<1x8x16xf32>
    %18 = vector.shape_cast %17 : vector<1x8x16xf32> to vector<8x16xf32>
    %19 = tpu.transpose %18, [1, 0] : vector<8x16xf32> -> vector<16x8xf32>
    %c0_25 = arith.constant 0 : index
    %c0_26 = arith.constant 0 : index
    %c0_27 = arith.constant 0 : index
    %20 = vector.load %arg5[%c0_25, %c0_26, %c0_27] : memref<4x16x8xf32, #tpu.memory_space<vmem>>, vector<1x16x8xf32>
    %21 = vector.shape_cast %20 : vector<1x16x8xf32> to vector<16x8xf32>
    %22 = vector.shape_cast %19 : vector<16x8xf32> to vector<1x16x8xf32>
    tpu.vector_store %arg5[%c0_25, %c0_26, %c0_27], %22 {strides = array<i32>} : memref<4x16x8xf32, #tpu.memory_space<vmem>>, vector<1x16x8xf32>,
    %c1_28 = arith.constant 1 : index
    %c0_29 = arith.constant 0 : index
    %c0_30 = arith.constant 0 : index
    %23 = vector.load %arg4[%c1_28, %c0_29, %c0_30] : memref<4x8x16xf32, #tpu.memory_space<vmem>>, vector<1x8x16xf32>
    %24 = vector.shape_cast %23 : vector<1x8x16xf32> to vector<8x16xf32>
    %25 = tpu.transpose %24, [1, 0] : vector<8x16xf32> -> vector<16x8xf32>
    %c1_31 = arith.constant 1 : index
    %c0_32 = arith.constant 0 : index
    %c0_33 = arith.constant 0 : index
    %26 = vector.load %arg5[%c1_31, %c0_32, %c0_33] : memref<4x16x8xf32, #tpu.memory_space<vmem>>, vector<1x16x8xf32>
    %27 = vector.shape_cast %26 : vector<1x16x8xf32> to vector<16x8xf32>
    %28 = vector.shape_cast %25 : vector<16x8xf32> to vector<1x16x8xf32>
    tpu.vector_store %arg5[%c1_31, %c0_32, %c0_33], %28 {strides = array<i32>} : memref<4x16x8xf32, #tpu.memory_space<vmem>>, vector<1x16x8xf32>,
    %c2_34 = arith.constant 2 : index
    %c0_35 = arith.constant 0 : index
    %c0_36 = arith.constant 0 : index
    %29 = vector.load %arg4[%c2_34, %c0_35, %c0_36] : memref<4x8x16xf32, #tpu.memory_space<vmem>>, vector<1x8x16xf32>
    %30 = vector.shape_cast %29 : vector<1x8x16xf32> to vector<8x16xf32>
    %31 = tpu.transpose %30, [1, 0] : vector<8x16xf32> -> vector<16x8xf32>
    %c2_37 = arith.constant 2 : index
    %c0_38 = arith.constant 0 : index
    %c0_39 = arith.constant 0 : index
    %32 = vector.load %arg5[%c2_37, %c0_38, %c0_39] : memref<4x16x8xf32, #tpu.memory_space<vmem>>, vector<1x16x8xf32>
    %33 = vector.shape_cast %32 : vector<1x16x8xf32> to vector<16x8xf32>
    %34 = vector.shape_cast %31 : vector<16x8xf32> to vector<1x16x8xf32>
    tpu.vector_store %arg5[%c2_37, %c0_38, %c0_39], %34 {strides = array<i32>} : memref<4x16x8xf32, #tpu.memory_space<vmem>>, vector<1x16x8xf32>,
    %c3_40 = arith.constant 3 : index
    %c0_41 = arith.constant 0 : index
    %c0_42 = arith.constant 0 : index
    %35 = vector.load %arg4[%c3_40, %c0_41, %c0_42] : memref<4x8x16xf32, #tpu.memory_space<vmem>>, vector<1x8x16xf32>
    %36 = vector.shape_cast %35 : vector<1x8x16xf32> to vector<8x16xf32>
    %37 = tpu.transpose %36, [1, 0] : vector<8x16xf32> -> vector<16x8xf32>
    %c3_43 = arith.constant 3 : index
    %c0_44 = arith.constant 0 : index
    %c0_45 = arith.constant 0 : index
    %38 = vector.load %arg5[%c3_43, %c0_44, %c0_45] : memref<4x16x8xf32, #tpu.memory_space<vmem>>, vector<1x16x8xf32>
    %39 = vector.shape_cast %38 : vector<1x16x8xf32> to vector<16x8xf32>
    %40 = vector.shape_cast %37 : vector<16x8xf32> to vector<1x16x8xf32>
    tpu.vector_store %arg5[%c3_43, %c0_44, %c0_45], %40 {strides = array<i32>} : memref<4x16x8xf32, #tpu.memory_space<vmem>>, vector<1x16x8xf32>,
    %c0_46 = arith.constant 0 : index
    %c1_47 = arith.constant 1 : index
    %c0_48 = arith.constant 0 : index
    %41 = tpu.strided_load %arg5[%c0_46, %c1_47, %c0_48] {strides = array<i32: 1, 2, 1>} : memref<4x16x8xf32, #tpu.memory_space<vmem>>, vector<4x7x8xf32>
    %c0_49 = arith.constant 0 : index
    %c2_50 = arith.constant 2 : index
    %c0_51 = arith.constant 0 : index
    %42 = tpu.strided_load %arg5[%c0_49, %c2_50, %c0_51] {strides = array<i32: 1, 2, 1>} : memref<4x16x8xf32, #tpu.memory_space<vmem>>, vector<4x7x8xf32>
    %43 = arith.maximumf %41, %42 : vector<4x7x8xf32>
    %c0_52 = arith.constant 0 : index
    %c3_53 = arith.constant 3 : index
    %c0_54 = arith.constant 0 : index
    %44 = tpu.strided_load %arg5[%c0_52, %c3_53, %c0_54] {strides = array<i32: 1, 2, 1>} : memref<4x16x8xf32, #tpu.memory_space<vmem>>, vector<4x7x8xf32>
    %45 = arith.maximumf %43, %44 : vector<4x7x8xf32>
    %c0_55 = arith.constant 0 : index
    %c1_56 = arith.constant 1 : index
    %c0_57 = arith.constant 0 : index
    %46 = vector.load %arg6[%c0_55, %c1_56, %c0_57] : memref<4x8x8xf32, #tpu.memory_space<vmem>>, vector<4x7x8xf32>
    tpu.vector_store %arg6[%c0_55, %c1_56, %c0_57], %45 {strides = array<i32>} : memref<4x8x8xf32, #tpu.memory_space<vmem>>, vector<4x7x8xf32>,
    %c0_58 = arith.constant 0 : index
    %c0_59 = arith.constant 0 : index
    %c0_60 = arith.constant 0 : index
    %47 = vector.load %arg5[%c0_58, %c0_59, %c0_60] : memref<4x16x8xf32, #tpu.memory_space<vmem>>, vector<4x1x8xf32>
    %c0_61 = arith.constant 0 : index
    %c1_62 = arith.constant 1 : index
    %c0_63 = arith.constant 0 : index
    %48 = vector.load %arg5[%c0_61, %c1_62, %c0_63] : memref<4x16x8xf32, #tpu.memory_space<vmem>>, vector<4x1x8xf32>
    %49 = arith.maximumf %47, %48 : vector<4x1x8xf32>
    %cst_64 = arith.constant 0.000000e+00 : f32
    %50 = vector.broadcast %cst_64 : f32 to vector<4x1x8xf32>
    %51 = arith.maximumf %49, %50 : vector<4x1x8xf32>
    %c0_65 = arith.constant 0 : index
    %c0_66 = arith.constant 0 : index
    %c0_67 = arith.constant 0 : index
    %52 = vector.load %arg6[%c0_65, %c0_66, %c0_67] : memref<4x8x8xf32, #tpu.memory_space<vmem>>, vector<4x1x8xf32>
    tpu.vector_store %arg6[%c0_65, %c0_66, %c0_67], %51 {strides = array<i32>} : memref<4x8x8xf32, #tpu.memory_space<vmem>>, vector<4x1x8xf32>,
    %c0_68 = arith.constant 0 : index
    %c0_69 = arith.constant 0 : index
    %c0_70 = arith.constant 0 : index
    %53 = vector.load %arg6[%c0_68, %c0_69, %c0_70] : memref<4x8x8xf32, #tpu.memory_space<vmem>>, vector<1x8x8xf32>
    %54 = vector.shape_cast %53 : vector<1x8x8xf32> to vector<8x8xf32>
    %55 = tpu.transpose %54, [1, 0] : vector<8x8xf32> -> vector<8x8xf32>
    %c0_71 = arith.constant 0 : index
    %c0_72 = arith.constant 0 : index
    %c0_73 = arith.constant 0 : index
    %c0_74 = arith.constant 0 : index
    %56 = vector.load %arg3[%c0_71, %c0_72, %c0_73, %c0_74] : memref<1x4x8x8xf32, #tpu.memory_space<vmem>>, vector<1x1x8x8xf32>
    %57 = vector.shape_cast %56 : vector<1x1x8x8xf32> to vector<8x8xf32>
    %58 = vector.shape_cast %55 : vector<8x8xf32> to vector<1x1x8x8xf32>
    tpu.vector_store %arg3[%c0_71, %c0_72, %c0_73, %c0_74], %58 {strides = array<i32>} : memref<1x4x8x8xf32, #tpu.memory_space<vmem>>, vector<1x1x8x8xf32>,
    %c1_75 = arith.constant 1 : index
    %c0_76 = arith.constant 0 : index
    %c0_77 = arith.constant 0 : index
    %59 = vector.load %arg6[%c1_75, %c0_76, %c0_77] : memref<4x8x8xf32, #tpu.memory_space<vmem>>, vector<1x8x8xf32>
    %60 = vector.shape_cast %59 : vector<1x8x8xf32> to vector<8x8xf32>
    %61 = tpu.transpose %60, [1, 0] : vector<8x8xf32> -> vector<8x8xf32>
    %c0_78 = arith.constant 0 : index
    %c1_79 = arith.constant 1 : index
    %c0_80 = arith.constant 0 : index
    %c0_81 = arith.constant 0 : index
    %62 = vector.load %arg3[%c0_78, %c1_79, %c0_80, %c0_81] : memref<1x4x8x8xf32, #tpu.memory_space<vmem>>, vector<1x1x8x8xf32>
    %63 = vector.shape_cast %62 : vector<1x1x8x8xf32> to vector<8x8xf32>
    %64 = vector.shape_cast %61 : vector<8x8xf32> to vector<1x1x8x8xf32>
    tpu.vector_store %arg3[%c0_78, %c1_79, %c0_80, %c0_81], %64 {strides = array<i32>} : memref<1x4x8x8xf32, #tpu.memory_space<vmem>>, vector<1x1x8x8xf32>,
    %c2_82 = arith.constant 2 : index
    %c0_83 = arith.constant 0 : index
    %c0_84 = arith.constant 0 : index
    %65 = vector.load %arg6[%c2_82, %c0_83, %c0_84] : memref<4x8x8xf32, #tpu.memory_space<vmem>>, vector<1x8x8xf32>
    %66 = vector.shape_cast %65 : vector<1x8x8xf32> to vector<8x8xf32>
    %67 = tpu.transpose %66, [1, 0] : vector<8x8xf32> -> vector<8x8xf32>
    %c0_85 = arith.constant 0 : index
    %c2_86 = arith.constant 2 : index
    %c0_87 = arith.constant 0 : index
    %c0_88 = arith.constant 0 : index
    %68 = vector.load %arg3[%c0_85, %c2_86, %c0_87, %c0_88] : memref<1x4x8x8xf32, #tpu.memory_space<vmem>>, vector<1x1x8x8xf32>
    %69 = vector.shape_cast %68 : vector<1x1x8x8xf32> to vector<8x8xf32>
    %70 = vector.shape_cast %67 : vector<8x8xf32> to vector<1x1x8x8xf32>
    tpu.vector_store %arg3[%c0_85, %c2_86, %c0_87, %c0_88], %70 {strides = array<i32>} : memref<1x4x8x8xf32, #tpu.memory_space<vmem>>, vector<1x1x8x8xf32>,
    %c3_89 = arith.constant 3 : index
    %c0_90 = arith.constant 0 : index
    %c0_91 = arith.constant 0 : index
    %71 = vector.load %arg6[%c3_89, %c0_90, %c0_91] : memref<4x8x8xf32, #tpu.memory_space<vmem>>, vector<1x8x8xf32>
    %72 = vector.shape_cast %71 : vector<1x8x8xf32> to vector<8x8xf32>
    %73 = tpu.transpose %72, [1, 0] : vector<8x8xf32> -> vector<8x8xf32>
    %c0_92 = arith.constant 0 : index
    %c3_93 = arith.constant 3 : index
    %c0_94 = arith.constant 0 : index
    %c0_95 = arith.constant 0 : index
    %74 = vector.load %arg3[%c0_92, %c3_93, %c0_94, %c0_95] : memref<1x4x8x8xf32, #tpu.memory_space<vmem>>, vector<1x1x8x8xf32>
    %75 = vector.shape_cast %74 : vector<1x1x8x8xf32> to vector<8x8xf32>
    %76 = vector.shape_cast %73 : vector<8x8xf32> to vector<1x1x8x8xf32>
    tpu.vector_store %arg3[%c0_92, %c3_93, %c0_94, %c0_95], %76 {strides = array<i32>} : memref<1x4x8x8xf32, #tpu.memory_space<vmem>>, vector<1x1x8x8xf32>,
    return
  }
  func.func @transform_0(%arg0: i32, %arg1: i32) -> (i32, i32, i32, i32) {
    %c0_i32 = arith.constant 0 : i32
    %c0_i32_0 = arith.constant 0 : i32
    %c0_i32_1 = arith.constant 0 : i32
    return %arg0, %arg1, %c0_i32, %c0_i32_0 : i32, i32, i32, i32
  }
  func.func @transform_1(%arg0: i32, %arg1: i32) -> (i32, i32, i32, i32) {
    %c0_i32 = arith.constant 0 : i32
    %c0_i32_0 = arith.constant 0 : i32
    %c0_i32_1 = arith.constant 0 : i32
    return %arg0, %arg1, %c0_i32, %c0_i32_0 : i32, i32, i32, i32
  }
}

</mosaic_0001>

<llo_original>
// kernel: a_call__.1
$region0: #{a_call__.1}
  #allocation0 [shape = 'u32[]', space=smem, size = 0x4, offset = 0x4, fixed_abs, tag = 'smem constant byte address 0x4 - core index']
  #allocation1 [shape = 'u32[144,128]{1,0:T(1,128)}', space=vmem, size = 0x12000, scoped, tag = 'internal scratch']
  #allocation2 [shape = 'f32[4,8,16]{2,1,0:T(8,128)}', space=vmem, size = 0x4000, scoped, tag = 'scratch operand']
  #allocation3 [shape = 'f32[4,16,8]{2,1,0:T(8,128)}', space=vmem, size = 0x8000, scoped, tag = 'scratch operand']
  #allocation4 [shape = 'f32[4,8,8]{2,1,0:T(8,128)}', space=vmem, size = 0x4000, scoped, tag = 'scratch operand']
  %s0 = inlined_call_operand.hbm [shape: f32[2,4,16,16], index: 0, kind: input, shape index: {}]
  %s1 = inlined_call_operand.hbm [shape: f32[2,4,8,8], index: 1, kind: output, shape index: {}]
  %s2 = sld [smem:[#allocation0]]
  $region41: #{a_call__.1} parent=0
    _
  %s4 = ssub.s32 1, %s2
  %s5 = scalar_select 0, %s4, %s2
  $region1: #{a_call__.1} parent=0
    #allocation5 [shape = 'u8[65536]{0}', space=vmem, size = 0x10000, scoped, tag = 'input window, operand 0']
    #allocation6 [shape = 's32[2]{0}', space=sflag, size = 0x8, scoped, tag = 'scoped memory for a_call__.1']
    #allocation7 [shape = 's32[2]{0}', space=sflag, size = 0x8, scoped, tag = 'scoped memory for a_call__.1']
    #allocation8 [shape = 'u8[32768]{0}', space=vmem, size = 0x8000, scoped, tag = 'output window, operand 0']
    %6 = vsyncpa [#allocation6], 0
    %s7 = scalar_lea.sflag [#allocation6], 1
    %8 = vsyncpa %s7, 0
    %9 = vsyncpa [#allocation7], 0
    %s10 = scalar_lea.sflag [#allocation7], 1
    %11 = vsyncpa %s10, 0
    loop: start=0, step=1, limit=4
    $region2: #{a_call__.1} parent=1 // loop_pre_header
      _
    $region3: #{a_call__.1} parent=1 // loop_header
      %s13 = sphi 0, %s17
      %p14 = scmp.ge.s32.totalorder %s13, 4
      %s20 = sphi 0, %s32
      %s21 = sphi 0, %s28
      %s22 = sphi 0, %s20
      %s23 = sphi 0, %s21
      %s24 = sphi 0, %s22
      %s25 = sphi 0, %s23
      %s37 = sphi 0, %s39
      %s40 = sphi 0, %s37
      %s41 = sphi 0, %s40
      %s57 = sphi 0, %s41
      %s65 = sphi 0, %s67
      %s68 = sphi 0, %s65
      %s69 = sphi 0, %s68
      %s85 = sphi 0, %s69
    $region4: #{a_call__.1} parent=1 // loop_header_branch
      %16 = sbr.rel (%p14) target = $region8
    $region5: #{a_call__.1} parent=1 // loop_body
      %s18 = ssub.s32 %s13, 1
      %s19 = ssub.s32 %s13, 2
      %s26 = sadd.s32 1, %s21
      %p27 = scmp.ge.s32.totalorder %s26, 1
      %s28 = scalar_select %p27, 0, %s26
      %s29 = sadd.s32 1, %s20
      %s30 = scalar_select %p27, %s29, %s20
      %p31 = scmp.ge.s32.totalorder %s30, 2
      %s32 = scalar_select %p31, 0, %s30
      %s33 = ssub.s32 %s20, %s32
      %s34 = ssub.s32 %s21, %s28
      %s35 = sor.u32 %s33, %s34
      %p36 = scmp.eq.s32.totalorder %s35, 0
      %s38 = sadd.s32 %s37, 1
      %s39 = scalar_select %p36, %s37, %s38
      %p42 = pneg %p36
      %p43 = scmp.eq.s32.totalorder %s13, 1
      %p44 = por %p42, %p43
      %p45 = scmp.ne.s32.totalorder %s37, %s40
      %p46 = scmp.eq.s32.totalorder %s13, 0
      %p47 = por %p45, %p46
      %p48 = scmp.ne.s32.totalorder %s37, %s40
      %p49 = scmp.eq.s32.totalorder %s18, 1
      %p50 = por %p48, %p49
      %p51 = scmp.ne.s32.totalorder %s40, %s41
      %p52 = scmp.eq.s32.totalorder %s18, 0
      %p53 = por %p51, %p52
      %p54 = scmp.ne.s32.totalorder %s40, %s41
      %p55 = scmp.eq.s32.totalorder %s19, 1
      %p56 = por %p54, %p55
      %p58 = scmp.ne.s32.totalorder %s41, %s57
      %p59 = scmp.eq.s32.totalorder %s19, 0
      %p60 = por %p58, %p59
      %s61 = ssub.s32 %s20, %s32
      %s62 = ssub.s32 %s21, %s28
      %s63 = sor.u32 %s61, %s62
      %p64 = scmp.eq.s32.totalorder %s63, 0
      %s66 = sadd.s32 %s65, 1
      %s67 = scalar_select %p64, %s65, %s66
      %p70 = pneg %p64
      %p71 = scmp.eq.s32.totalorder %s13, 1
      %p72 = por %p70, %p71
      %p73 = scmp.ne.s32.totalorder %s65, %s68
      %p74 = scmp.eq.s32.totalorder %s13, 0
      %p75 = por %p73, %p74
      %p76 = scmp.ne.s32.totalorder %s65, %s68
      %p77 = scmp.eq.s32.totalorder %s18, 1
      %p78 = por %p76, %p77
      %p79 = scmp.ne.s32.totalorder %s68, %s69
      %p80 = scmp.eq.s32.totalorder %s18, 0
      %p81 = por %p79, %p80
      %p82 = scmp.ne.s32.totalorder %s68, %s69
      %p83 = scmp.eq.s32.totalorder %s19, 1
      %p84 = por %p82, %p83
      %p86 = scmp.ne.s32.totalorder %s69, %s85
      %p87 = scmp.eq.s32.totalorder %s19, 0
      %p88 = por %p86, %p87
      %p89 = scmp.le.s32.totalorder 1, %s13
      %p90 = scmp.lt.s32.totalorder %s13, 3
      %p91 = pnand %p89, %p90
      %p92 = pneg %p91
      // Predicated region
      $region9: #{a_call__.1} parent=5 // pred_check
        _
      $region10: #{a_call__.1} parent=5 // pred_check_branch
        %94 = sbr.rel (%p91) target = $region12
      $region11: #{a_call__.1} parent=5 // pred_region
        %s95 = ssub.s32 %s13, 1
      $region12: #{a_call__.1} parent=5 // pred_fallthru
        _
      %p96 = scmp.lt.s32.totalorder %s13, 2
      // Predicated region
      $region13: #{a_call__.1} parent=5 // pred_check
        %p97 = pneg %p96
      $region14: #{a_call__.1} parent=5 // pred_check_branch
        %99 = sbr.rel (%p97) target = $region16
      $region15: #{a_call__.1} parent=5 // pred_region
        // Predicated region
        $region17: #{a_call__.1} parent=15 // pred_check
          %p100 = pneg %p47
        $region18: #{a_call__.1} parent=15 // pred_check_branch
          %102 = sbr.rel (%p100) target = $region20
        $region19: #{a_call__.1} parent=15 // pred_region
          %s103 = sand.u32 %s37, 1
          %s104 = scalar_lea.sflag [#allocation6], %s103
          %s105 = sand.u32 %s37, 1
          %s106 = smul.addr %s105, 64
          %s107 = scalar_lea.vmem [#allocation5], %s106
          %s108 = smul.u32 4, %s21
          %s110 = ssub.s32 1024, 1024
          %111 = vsyncadd %s104, %s110
          %s112 = smul.addr %s108, 2
          %s113 = smul.addr %s20, 8
          %s114 = sadd.s32 %s112, %s113
          %s115 = smul.addr %s114, 128
          %s116 = scalar_lea.hbm %s0, %s115
          %s117 = sshll.u32 %s107, 4
          %s118 = int_to_ptr.vmem [resolvable:$true] %s117
          %123 = dma.hbm_to_vmem [thread:$0]  %s116, 1024, %s118, %s104, 128, 128, 8
        $region20: #{a_call__.1} parent=15 // pred_fallthru
          _
      $region16: #{a_call__.1} parent=5 // pred_fallthru
        _
      %p124 = scmp.le.s32.totalorder 1, %s13
      %p125 = scmp.lt.s32.totalorder %s13, 3
      %p126 = pnand %p124, %p125
      %p127 = pneg %p126
      // Predicated region
      $region21: #{a_call__.1} parent=5 // pred_check
        _
      $region22: #{a_call__.1} parent=5 // pred_check_branch
        %129 = sbr.rel (%p126) target = $region24
      $region23: #{a_call__.1} parent=5 // pred_region
        %s130 = ssub.s32 %s13, 1
        %s131 = sand.u32 %s40, 1
        %s132 = scalar_lea.sflag [#allocation6], %s131
        %s133 = sand.u32 %s40, 1
        %s134 = smul.addr %s133, 64
        %s135 = scalar_lea.vmem [#allocation5], %s134
        // Predicated region
        $region25: #{a_call__.1} parent=23 // pred_check
          %p136 = pneg %p53
        $region26: #{a_call__.1} parent=23 // pred_check_branch
          %138 = sbr.rel (%p136) target = $region28
        $region27: #{a_call__.1} parent=23 // pred_region
          %139 = dma.done %s132, 1024
        $region28: #{a_call__.1} parent=23 // pred_fallthru
          _
        %s140 = sand.u32 %s40, 1
        %s141 = scalar_lea.sflag [#allocation6], %s140
        %s142 = sand.u32 %s40, 1
        %s143 = smul.addr %s142, 64
        %s144 = scalar_lea.vmem [#allocation5], %s143
        %p145 = pneg %p53
        %p146 = pneg %p50
        %p147 = pneg %p81
        %p148 = pneg %p78
        %s149 = sand.u32 %s68, 1
        %s150 = scalar_lea.sflag [#allocation7], %s149
        %s151 = sand.u32 %s68, 1
        %s152 = smul.addr %s151, 32
        %s153 = scalar_lea.vmem [#allocation8], %s152
        %s154 = smul.u32 4, %s23
        %s155 = smul.u32 4, %s23
        %s156 = scalar_lea.vmem %s135, 1 [#allocation5]
        %v157 = vld [vmem:[%s156] ss:$2 sm:$0x7f]
        %s158 = scalar_lea.vmem %s135, 17 [#allocation5]
        %v159 = vld [vmem:[%s158] ss:$2 sm:$0x7f]
        %s160 = scalar_lea.vmem %s135, 33 [#allocation5]
        %v161 = vld [vmem:[%s160] ss:$2 sm:$0x7f]
        %s162 = scalar_lea.vmem %s135, 49 [#allocation5]
        %v163 = vld [vmem:[%s162] ss:$2 sm:$0x7f]
        %s164 = scalar_lea.vmem %s135, 2 [#allocation5]
        %v165 = vld [vmem:[%s164] ss:$2 sm:$0x7f]
        %s166 = scalar_lea.vmem %s135, 18 [#allocation5]
        %v167 = vld [vmem:[%s166] ss:$2 sm:$0x7f]
        %s168 = scalar_lea.vmem %s135, 34 [#allocation5]
        %v169 = vld [vmem:[%s168] ss:$2 sm:$0x7f]
        %s170 = scalar_lea.vmem %s135, 50 [#allocation5]
        %v171 = vld [vmem:[%s170] ss:$2 sm:$0x7f]
        %v172 = vmax.f32 %v157, %v165
        %v173 = vmax.f32 %v159, %v167
        %v174 = vmax.f32 %v161, %v169
        %v175 = vmax.f32 %v163, %v171
        %s176 = scalar_lea.vmem %s135, 3 [#allocation5]
        %v177 = vld [vmem:[%s176] ss:$2 sm:$0x7f]
        %s178 = scalar_lea.vmem %s135, 19 [#allocation5]
        %v179 = vld [vmem:[%s178] ss:$2 sm:$0x7f]
        %s180 = scalar_lea.vmem %s135, 35 [#allocation5]
        %v181 = vld [vmem:[%s180] ss:$2 sm:$0x7f]
        %s182 = scalar_lea.vmem %s135, 51 [#allocation5]
        %v183 = vld [vmem:[%s182] ss:$2 sm:$0x7f]
        %v184 = vmax.f32 %v172, %v177
        %v185 = vmax.f32 %v173, %v179
        %v186 = vmax.f32 %v174, %v181
        %v187 = vmax.f32 %v175, %v183
        %vm188 = vcmask 129024
        %189 = vst.msk [vmem:[#allocation2 + $0x1] sm:$0x7f] %vm188, %v184
        %190 = vst.msk [vmem:[#allocation2 + $0x9] sm:$0x7f] %vm188, %v185
        %191 = vst.msk [vmem:[#allocation2 + $0x11] sm:$0x7f] %vm188, %v186
        %192 = vst.msk [vmem:[#allocation2 + $0x19] sm:$0x7f] %vm188, %v187
        %v193 = vld [vmem:[%s135] sm:$0x1]
        %v194 = vld [vmem:[%s135 + $0x10] sm:$0x1]
        %v195 = vld [vmem:[%s135 + $0x20] sm:$0x1]
        %v196 = vld [vmem:[%s135 + $0x30] sm:$0x1]
        %v197 = vld [vmem:[%s135 + $0x1] sm:$0x1]
        %v198 = vld [vmem:[%s135 + $0x11] sm:$0x1]
        %v199 = vld [vmem:[%s135 + $0x21] sm:$0x1]
        %v200 = vld [vmem:[%s135 + $0x31] sm:$0x1]
        %v201 = vmax.f32 %v193, %v197
        %v202 = vmax.f32 %v194, %v198
        %v203 = vmax.f32 %v195, %v199
        %v204 = vmax.f32 %v196, %v200
        %v205 = vmax.f32 %v201, 0.0
        %v206 = vmax.f32 %v202, 0.0
        %v207 = vmax.f32 %v203, 0.0
        %v208 = vmax.f32 %v204, 0.0
        %vm209 = vcmask 122880
        %210 = vst.msk [vmem:[#allocation2] sm:$0x1] %vm209, %v205
        %211 = vst.msk [vmem:[#allocation2 + $0x8] sm:$0x1] %vm209, %v206
        %212 = vst.msk [vmem:[#allocation2 + $0x10] sm:$0x1] %vm209, %v207
        %213 = vst.msk [vmem:[#allocation2 + $0x18] sm:$0x1] %vm209, %v208
        %v214 = vld [vmem:[#allocation2] sm:$0xff]
        %215 = vxpose.xlu0.b32.start [1/16] %v214, 128
        %216 = vxpose.xlu0.b32.cont [2/16] 0.0, 128
        %217 = vxpose.xlu0.b32.cont [3/16] 0.0, 128
        %218 = vxpose.xlu0.b32.cont [4/16] 0.0, 128
        %219 = vxpose.xlu0.b32.cont [5/16] 0.0, 128
        %220 = vxpose.xlu0.b32.cont [6/16] 0.0, 128
        %221 = vxpose.xlu0.b32.cont [7/16] 0.0, 128
        %222 = vxpose.xlu0.b32.cont [8/16] 0.0, 128
        %223 = vxpose.xlu0.b32.cont [9/16] 0.0, 128
        %224 = vxpose.xlu0.b32.cont [10/16] 0.0, 128
        %225 = vxpose.xlu0.b32.cont [11/16] 0.0, 128
        %226 = vxpose.xlu0.b32.cont [12/16] 0.0, 128
        %227 = vxpose.xlu0.b32.cont [13/16] 0.0, 128
        %228 = vxpose.xlu0.b32.cont [14/16] 0.0, 128
        %229 = vxpose.xlu0.b32.cont [15/16] 0.0, 128
        %230 = vxpose.xlu0.b32.end [16/16] 0.0, 128
        %v231 = vpop.trf.xlu0
        %v232 = vpop.trf.xlu0
        %v233 = vpop.trf.xlu0
        %v234 = vpop.trf.xlu0
        %v235 = vpop.trf.xlu0
        %v236 = vpop.trf.xlu0
        %v237 = vpop.trf.xlu0
        %v238 = vpop.trf.xlu0
        %v239 = vpop.trf.xlu0
        %v240 = vpop.trf.xlu0
        %v241 = vpop.trf.xlu0
        %v242 = vpop.trf.xlu0
        %v243 = vpop.trf.xlu0
        %v244 = vpop.trf.xlu0
        %v245 = vpop.trf.xlu0
        %v246 = vpop.trf.xlu0
        %vm247 = vcmask 64512
        %248 = vst.msk [vmem:[#allocation3] sm:$0xff] %vm247, %v231
        %249 = vst.msk [vmem:[#allocation3 + $0x8] sm:$0xff] %vm247, %v232
        %s250 = scalar_lea.vmem [#allocation2], 8
        %v251 = vld [vmem:[%s250] sm:$0xff]
        %252 = vxpose.xlu0.b32.start [1/16] %v251, 128
        %253 = vxpose.xlu0.b32.cont [2/16] 0.0, 128
        %254 = vxpose.xlu0.b32.cont [3/16] 0.0, 128
        %255 = vxpose.xlu0.b32.cont [4/16] 0.0, 128
        %256 = vxpose.xlu0.b32.cont [5/16] 0.0, 128
        %257 = vxpose.xlu0.b32.cont [6/16] 0.0, 128
        %258 = vxpose.xlu0.b32.cont [7/16] 0.0, 128
        %259 = vxpose.xlu0.b32.cont [8/16] 0.0, 128
        %260 = vxpose.xlu0.b32.cont [9/16] 0.0, 128
        %261 = vxpose.xlu0.b32.cont [10/16] 0.0, 128
        %262 = vxpose.xlu0.b32.cont [11/16] 0.0, 128
        %263 = vxpose.xlu0.b32.cont [12/16] 0.0, 128
        %264 = vxpose.xlu0.b32.cont [13/16] 0.0, 128
        %265 = vxpose.xlu0.b32.cont [14/16] 0.0, 128
        %266 = vxpose.xlu0.b32.cont [15/16] 0.0, 128
        %267 = vxpose.xlu0.b32.end [16/16] 0.0, 128
        %v268 = vpop.trf.xlu0
        %v269 = vpop.trf.xlu0
        %v270 = vpop.trf.xlu0
        %v271 = vpop.trf.xlu0
        %v272 = vpop.trf.xlu0
        %v273 = vpop.trf.xlu0
        %v274 = vpop.trf.xlu0
        %v275 = vpop.trf.xlu0
        %v276 = vpop.trf.xlu0
        %v277 = vpop.trf.xlu0
        %v278 = vpop.trf.xlu0
        %v279 = vpop.trf.xlu0
        %v280 = vpop.trf.xlu0
        %v281 = vpop.trf.xlu0
        %v282 = vpop.trf.xlu0
        %v283 = vpop.trf.xlu0
        %s284 = scalar_lea.vmem [#allocation3], 16
        %285 = vst.msk [vmem:[%s284] sm:$0xff] %vm247, %v268
        %286 = vst.msk [vmem:[%s284 + $0x8] sm:$0xff] %vm247, %v269
        %s287 = scalar_lea.vmem [#allocation2], 16
        %v288 = vld [vmem:[%s287] sm:$0xff]
        %289 = vxpose.xlu0.b32.start [1/16] %v288, 128
        %290 = vxpose.xlu0.b32.cont [2/16] 0.0, 128
        %291 = vxpose.xlu0.b32.cont [3/16] 0.0, 128
        %292 = vxpose.xlu0.b32.cont [4/16] 0.0, 128
        %293 = vxpose.xlu0.b32.cont [5/16] 0.0, 128
        %294 = vxpose.xlu0.b32.cont [6/16] 0.0, 128
        %295 = vxpose.xlu0.b32.cont [7/16] 0.0, 128
        %296 = vxpose.xlu0.b32.cont [8/16] 0.0, 128
        %297 = vxpose.xlu0.b32.cont [9/16] 0.0, 128
        %298 = vxpose.xlu0.b32.cont [10/16] 0.0, 128
        %299 = vxpose.xlu0.b32.cont [11/16] 0.0, 128
        %300 = vxpose.xlu0.b32.cont [12/16] 0.0, 128
        %301 = vxpose.xlu0.b32.cont [13/16] 0.0, 128
        %302 = vxpose.xlu0.b32.cont [14/16] 0.0, 128
        %303 = vxpose.xlu0.b32.cont [15/16] 0.0, 128
        %304 = vxpose.xlu0.b32.end [16/16] 0.0, 128
        %v305 = vpop.trf.xlu0
        %v306 = vpop.trf.xlu0
        %v307 = vpop.trf.xlu0
        %v308 = vpop.trf.xlu0
        %v309 = vpop.trf.xlu0
        %v310 = vpop.trf.xlu0
        %v311 = vpop.trf.xlu0
        %v312 = vpop.trf.xlu0
        %v313 = vpop.trf.xlu0
        %v314 = vpop.trf.xlu0
        %v315 = vpop.trf.xlu0
        %v316 = vpop.trf.xlu0
        %v317 = vpop.trf.xlu0
        %v318 = vpop.trf.xlu0
        %v319 = vpop.trf.xlu0
        %v320 = vpop.trf.xlu0
        %s321 = scalar_lea.vmem [#allocation3], 32
        %322 = vst.msk [vmem:[%s321] sm:$0xff] %vm247, %v305
        %323 = vst.msk [vmem:[%s321 + $0x8] sm:$0xff] %vm247, %v306
        %s324 = scalar_lea.vmem [#allocation2], 24
        %v325 = vld [vmem:[%s324] sm:$0xff]
        %326 = vxpose.xlu0.b32.start [1/16] %v325, 128
        %327 = vxpose.xlu0.b32.cont [2/16] 0.0, 128
        %328 = vxpose.xlu0.b32.cont [3/16] 0.0, 128
        %329 = vxpose.xlu0.b32.cont [4/16] 0.0, 128
        %330 = vxpose.xlu0.b32.cont [5/16] 0.0, 128
        %331 = vxpose.xlu0.b32.cont [6/16] 0.0, 128
        %332 = vxpose.xlu0.b32.cont [7/16] 0.0, 128
        %333 = vxpose.xlu0.b32.cont [8/16] 0.0, 128
        %334 = vxpose.xlu0.b32.cont [9/16] 0.0, 128
        %335 = vxpose.xlu0.b32.cont [10/16] 0.0, 128
        %336 = vxpose.xlu0.b32.cont [11/16] 0.0, 128
        %337 = vxpose.xlu0.b32.cont [12/16] 0.0, 128
        %338 = vxpose.xlu0.b32.cont [13/16] 0.0, 128
        %339 = vxpose.xlu0.b32.cont [14/16] 0.0, 128
        %340 = vxpose.xlu0.b32.cont [15/16] 0.0, 128
        %341 = vxpose.xlu0.b32.end [16/16] 0.0, 128
        %v342 = vpop.trf.xlu0
        %v343 = vpop.trf.xlu0
        %v344 = vpop.trf.xlu0
        %v345 = vpop.trf.xlu0
        %v346 = vpop.trf.xlu0
        %v347 = vpop.trf.xlu0
        %v348 = vpop.trf.xlu0
        %v349 = vpop.trf.xlu0
        %v350 = vpop.trf.xlu0
        %v351 = vpop.trf.xlu0
        %v352 = vpop.trf.xlu0
        %v353 = vpop.trf.xlu0
        %v354 = vpop.trf.xlu0
        %v355 = vpop.trf.xlu0
        %v356 = vpop.trf.xlu0
        %v357 = vpop.trf.xlu0
        %s358 = scalar_lea.vmem [#allocation3], 48
        %359 = vst.msk [vmem:[%s358] sm:$0xff] %vm247, %v342
        %360 = vst.msk [vmem:[%s358 + $0x8] sm:$0xff] %vm247, %v343
        %s361 = scalar_lea.vmem [#allocation3], 1
        %v362 = vld [vmem:[%s361] ss:$2 sm:$0x7f]
        %s363 = scalar_lea.vmem [#allocation3], 17
        %v364 = vld [vmem:[%s363] ss:$2 sm:$0x7f]
        %s365 = scalar_lea.vmem [#allocation3], 33
        %v366 = vld [vmem:[%s365] ss:$2 sm:$0x7f]
        %s367 = scalar_lea.vmem [#allocation3], 49
        %v368 = vld [vmem:[%s367] ss:$2 sm:$0x7f]
        %s369 = scalar_lea.vmem [#allocation3], 2
        %v370 = vld [vmem:[%s369] ss:$2 sm:$0x7f]
        %s371 = scalar_lea.vmem [#allocation3], 18
        %v372 = vld [vmem:[%s371] ss:$2 sm:$0x7f]
        %s373 = scalar_lea.vmem [#allocation3], 34
        %v374 = vld [vmem:[%s373] ss:$2 sm:$0x7f]
        %s375 = scalar_lea.vmem [#allocation3], 50
        %v376 = vld [vmem:[%s375] ss:$2 sm:$0x7f]
        %v377 = vmax.f32 %v362, %v370
        %v378 = vmax.f32 %v364, %v372
        %v379 = vmax.f32 %v366, %v374
        %v380 = vmax.f32 %v368, %v376
        %s381 = scalar_lea.vmem [#allocation3], 3
        %v382 = vld [vmem:[%s381] ss:$2 sm:$0x7f]
        %s383 = scalar_lea.vmem [#allocation3], 19
        %v384 = vld [vmem:[%s383] ss:$2 sm:$0x7f]
        %s385 = scalar_lea.vmem [#allocation3], 35
        %v386 = vld [vmem:[%s385] ss:$2 sm:$0x7f]
        %s387 = scalar_lea.vmem [#allocation3], 51
        %v388 = vld [vmem:[%s387] ss:$2 sm:$0x7f]
        %v389 = vmax.f32 %v377, %v382
        %v390 = vmax.f32 %v378, %v384
        %v391 = vmax.f32 %v379, %v386
        %v392 = vmax.f32 %v380, %v388
        %vm393 = vcmask 63488
        %394 = vst.msk [vmem:[#allocation4 + $0x1] sm:$0x7f] %vm393, %v389
        %395 = vst.msk [vmem:[#allocation4 + $0x9] sm:$0x7f] %vm393, %v390
        %396 = vst.msk [vmem:[#allocation4 + $0x11] sm:$0x7f] %vm393, %v391
        %397 = vst.msk [vmem:[#allocation4 + $0x19] sm:$0x7f] %vm393, %v392
        %v398 = vld [vmem:[#allocation3] sm:$0x1]
        %v399 = vld [vmem:[#allocation3 + $0x10] sm:$0x1]
        %v400 = vld [vmem:[#allocation3 + $0x20] sm:$0x1]
        %v401 = vld [vmem:[#allocation3 + $0x30] sm:$0x1]
        %v402 = vld [vmem:[#allocation3 + $0x1] sm:$0x1]
        %v403 = vld [vmem:[#allocation3 + $0x11] sm:$0x1]
        %v404 = vld [vmem:[#allocation3 + $0x21] sm:$0x1]
        %v405 = vld [vmem:[#allocation3 + $0x31] sm:$0x1]
        %v406 = vmax.f32 %v398, %v402
        %v407 = vmax.f32 %v399, %v403
        %v408 = vmax.f32 %v400, %v404
        %v409 = vmax.f32 %v401, %v405
        %v410 = vmax.f32 %v406, 0.0
        %v411 = vmax.f32 %v407, 0.0
        %v412 = vmax.f32 %v408, 0.0
        %v413 = vmax.f32 %v409, 0.0
        %vm414 = vcmask 57344
        %415 = vst.msk [vmem:[#allocation4] sm:$0x1] %vm414, %v410
        %416 = vst.msk [vmem:[#allocation4 + $0x8] sm:$0x1] %vm414, %v411
        %417 = vst.msk [vmem:[#allocation4 + $0x10] sm:$0x1] %vm414, %v412
        %418 = vst.msk [vmem:[#allocation4 + $0x18] sm:$0x1] %vm414, %v413
        %v419 = vld [vmem:[#allocation4] sm:$0xff]
        %420 = vxpose.xlu0.b32.start [1/16] %v419, 128
        %421 = vxpose.xlu0.b32.cont [2/16] 0.0, 128
        %422 = vxpose.xlu0.b32.cont [3/16] 0.0, 128
        %423 = vxpose.xlu0.b32.cont [4/16] 0.0, 128
        %424 = vxpose.xlu0.b32.cont [5/16] 0.0, 128
        %425 = vxpose.xlu0.b32.cont [6/16] 0.0, 128
        %426 = vxpose.xlu0.b32.cont [7/16] 0.0, 128
        %427 = vxpose.xlu0.b32.cont [8/16] 0.0, 128
        %428 = vxpose.xlu0.b32.cont [9/16] 0.0, 128
        %429 = vxpose.xlu0.b32.cont [10/16] 0.0, 128
        %430 = vxpose.xlu0.b32.cont [11/16] 0.0, 128
        %431 = vxpose.xlu0.b32.cont [12/16] 0.0, 128
        %432 = vxpose.xlu0.b32.cont [13/16] 0.0, 128
        %433 = vxpose.xlu0.b32.cont [14/16] 0.0, 128
        %434 = vxpose.xlu0.b32.cont [15/16] 0.0, 128
        %435 = vxpose.xlu0.b32.end [16/16] 0.0, 128
        %v436 = vpop.trf.xlu0
        %v437 = vpop.trf.xlu0
        %v438 = vpop.trf.xlu0
        %v439 = vpop.trf.xlu0
        %v440 = vpop.trf.xlu0
        %v441 = vpop.trf.xlu0
        %v442 = vpop.trf.xlu0
        %v443 = vpop.trf.xlu0
        %v444 = vpop.trf.xlu0
        %v445 = vpop.trf.xlu0
        %v446 = vpop.trf.xlu0
        %v447 = vpop.trf.xlu0
        %v448 = vpop.trf.xlu0
        %v449 = vpop.trf.xlu0
        %v450 = vpop.trf.xlu0
        %v451 = vpop.trf.xlu0
        %452 = vst.msk [vmem:[%s153] sm:$0xff] %vm247, %v436
        %s453 = scalar_lea.vmem [#allocation4], 8
        %v454 = vld [vmem:[%s453] sm:$0xff]
        %455 = vxpose.xlu0.b32.start [1/16] %v454, 128
        %456 = vxpose.xlu0.b32.cont [2/16] 0.0, 128
        %457 = vxpose.xlu0.b32.cont [3/16] 0.0, 128
        %458 = vxpose.xlu0.b32.cont [4/16] 0.0, 128
        %459 = vxpose.xlu0.b32.cont [5/16] 0.0, 128
        %460 = vxpose.xlu0.b32.cont [6/16] 0.0, 128
        %461 = vxpose.xlu0.b32.cont [7/16] 0.0, 128
        %462 = vxpose.xlu0.b32.cont [8/16] 0.0, 128
        %463 = vxpose.xlu0.b32.cont [9/16] 0.0, 128
        %464 = vxpose.xlu0.b32.cont [10/16] 0.0, 128
        %465 = vxpose.xlu0.b32.cont [11/16] 0.0, 128
        %466 = vxpose.xlu0.b32.cont [12/16] 0.0, 128
        %467 = vxpose.xlu0.b32.cont [13/16] 0.0, 128
        %468 = vxpose.xlu0.b32.cont [14/16] 0.0, 128
        %469 = vxpose.xlu0.b32.cont [15/16] 0.0, 128
        %470 = vxpose.xlu0.b32.end [16/16] 0.0, 128
        %v471 = vpop.trf.xlu0
        %v472 = vpop.trf.xlu0
        %v473 = vpop.trf.xlu0
        %v474 = vpop.trf.xlu0
        %v475 = vpop.trf.xlu0
        %v476 = vpop.trf.xlu0
        %v477 = vpop.trf.xlu0
        %v478 = vpop.trf.xlu0
        %v479 = vpop.trf.xlu0
        %v480 = vpop.trf.xlu0
        %v481 = vpop.trf.xlu0
        %v482 = vpop.trf.xlu0
        %v483 = vpop.trf.xlu0
        %v484 = vpop.trf.xlu0
        %v485 = vpop.trf.xlu0
        %v486 = vpop.trf.xlu0
        %s487 = scalar_lea.vmem %s153, 8 [#allocation8]
        %488 = vst.msk [vmem:[%s487] sm:$0xff] %vm247, %v471
        %s489 = scalar_lea.vmem [#allocation4], 16
        %v490 = vld [vmem:[%s489] sm:$0xff]
        %491 = vxpose.xlu0.b32.start [1/16] %v490, 128
        %492 = vxpose.xlu0.b32.cont [2/16] 0.0, 128
        %493 = vxpose.xlu0.b32.cont [3/16] 0.0, 128
        %494 = vxpose.xlu0.b32.cont [4/16] 0.0, 128
        %495 = vxpose.xlu0.b32.cont [5/16] 0.0, 128
        %496 = vxpose.xlu0.b32.cont [6/16] 0.0, 128
        %497 = vxpose.xlu0.b32.cont [7/16] 0.0, 128
        %498 = vxpose.xlu0.b32.cont [8/16] 0.0, 128
        %499 = vxpose.xlu0.b32.cont [9/16] 0.0, 128
        %500 = vxpose.xlu0.b32.cont [10/16] 0.0, 128
        %501 = vxpose.xlu0.b32.cont [11/16] 0.0, 128
        %502 = vxpose.xlu0.b32.cont [12/16] 0.0, 128
        %503 = vxpose.xlu0.b32.cont [13/16] 0.0, 128
        %504 = vxpose.xlu0.b32.cont [14/16] 0.0, 128
        %505 = vxpose.xlu0.b32.cont [15/16] 0.0, 128
        %506 = vxpose.xlu0.b32.end [16/16] 0.0, 128
        %v507 = vpop.trf.xlu0
        %v508 = vpop.trf.xlu0
        %v509 = vpop.trf.xlu0
        %v510 = vpop.trf.xlu0
        %v511 = vpop.trf.xlu0
        %v512 = vpop.trf.xlu0
        %v513 = vpop.trf.xlu0
        %v514 = vpop.trf.xlu0
        %v515 = vpop.trf.xlu0
        %v516 = vpop.trf.xlu0
        %v517 = vpop.trf.xlu0
        %v518 = vpop.trf.xlu0
        %v519 = vpop.trf.xlu0
        %v520 = vpop.trf.xlu0
        %v521 = vpop.trf.xlu0
        %v522 = vpop.trf.xlu0
        %s523 = scalar_lea.vmem %s153, 16 [#allocation8]
        %524 = vst.msk [vmem:[%s523] sm:$0xff] %vm247, %v507
        %s525 = scalar_lea.vmem [#allocation4], 24
        %v526 = vld [vmem:[%s525] sm:$0xff]
        %527 = vxpose.xlu0.b32.start [1/16] %v526, 128
        %528 = vxpose.xlu0.b32.cont [2/16] 0.0, 128
        %529 = vxpose.xlu0.b32.cont [3/16] 0.0, 128
        %530 = vxpose.xlu0.b32.cont [4/16] 0.0, 128
        %531 = vxpose.xlu0.b32.cont [5/16] 0.0, 128
        %532 = vxpose.xlu0.b32.cont [6/16] 0.0, 128
        %533 = vxpose.xlu0.b32.cont [7/16] 0.0, 128
        %534 = vxpose.xlu0.b32.cont [8/16] 0.0, 128
        %535 = vxpose.xlu0.b32.cont [9/16] 0.0, 128
        %536 = vxpose.xlu0.b32.cont [10/16] 0.0, 128
        %537 = vxpose.xlu0.b32.cont [11/16] 0.0, 128
        %538 = vxpose.xlu0.b32.cont [12/16] 0.0, 128
        %539 = vxpose.xlu0.b32.cont [13/16] 0.0, 128
        %540 = vxpose.xlu0.b32.cont [14/16] 0.0, 128
        %541 = vxpose.xlu0.b32.cont [15/16] 0.0, 128
        %542 = vxpose.xlu0.b32.end [16/16] 0.0, 128
        %v543 = vpop.trf.xlu0
        %v544 = vpop.trf.xlu0
        %v545 = vpop.trf.xlu0
        %v546 = vpop.trf.xlu0
        %v547 = vpop.trf.xlu0
        %v548 = vpop.trf.xlu0
        %v549 = vpop.trf.xlu0
        %v550 = vpop.trf.xlu0
        %v551 = vpop.trf.xlu0
        %v552 = vpop.trf.xlu0
        %v553 = vpop.trf.xlu0
        %v554 = vpop.trf.xlu0
        %v555 = vpop.trf.xlu0
        %v556 = vpop.trf.xlu0
        %v557 = vpop.trf.xlu0
        %v558 = vpop.trf.xlu0
        %s559 = scalar_lea.vmem %s153, 24 [#allocation8]
        %560 = vst.msk [vmem:[%s559] sm:$0xff] %vm247, %v543
        %s561 = sand.u32 %s68, 1
        %s562 = scalar_lea.sflag [#allocation7], %s561
        %s563 = sand.u32 %s68, 1
        %s564 = smul.addr %s563, 32
        %s565 = scalar_lea.vmem [#allocation8], %s564
        // Predicated region
        $region29: #{a_call__.1} parent=23 // pred_check
          %p566 = pneg %p78
        $region30: #{a_call__.1} parent=23 // pred_check_branch
          %568 = sbr.rel (%p566) target = $region32
        $region31: #{a_call__.1} parent=23 // pred_region
          %s569 = smul.u32 4, %s23
          %s571 = ssub.s32 512, 512
          %572 = vsyncadd %s562, %s571
          %s573 = smul.addr %s22, 4
          %s574 = sadd.s32 %s569, %s573
          %s575 = smul.addr %s574, 128
          %s576 = scalar_lea.hbm %s1, %s575
          %s577 = sshll.u32 %s565, 4
          %s578 = int_to_ptr.vmem [resolvable:$true] %s577
          %583 = dma.vmem_to_hbm [thread:$0]  %s578, 512, %s576, %s562, 128, 128, 8
        $region32: #{a_call__.1} parent=23 // pred_fallthru
          _
      $region24: #{a_call__.1} parent=5 // pred_fallthru
        _
      %p584 = scmp.le.s32.totalorder 2, %s13
      // Predicated region
      $region33: #{a_call__.1} parent=5 // pred_check
        %p585 = pneg %p584
      $region34: #{a_call__.1} parent=5 // pred_check_branch
        %587 = sbr.rel (%p585) target = $region36
      $region35: #{a_call__.1} parent=5 // pred_region
        %s588 = ssub.s32 %s13, 2
        // Predicated region
        $region37: #{a_call__.1} parent=35 // pred_check
          %p589 = pneg %p84
        $region38: #{a_call__.1} parent=35 // pred_check_branch
          %591 = sbr.rel (%p589) target = $region40
        $region39: #{a_call__.1} parent=35 // pred_region
          %s592 = sand.u32 %s69, 1
          %s593 = scalar_lea.sflag [#allocation7], %s592
          %s594 = sand.u32 %s69, 1
          %s595 = smul.addr %s594, 32
          %s596 = scalar_lea.vmem [#allocation8], %s595
          %597 = dma.done %s593, 512
        $region40: #{a_call__.1} parent=35 // pred_fallthru
          _
      $region36: #{a_call__.1} parent=5 // pred_fallthru
        _
    $region6: #{a_call__.1} parent=1 // loop_footer
      %s17 = sadd.s32 1, %s13
    $region7: #{a_call__.1} parent=1 // loop_footer_branch
      %12 = sbr.rel target = $region3
    $region8: #{a_call__.1} parent=1 // loop_exit
      _
    %598 = vsyncpa [#allocation6], 1
    %s599 = scalar_lea.sflag [#allocation6], 1
    %600 = vsyncpa %s599, 1
    %601 = vsyncpa [#allocation7], 1
    %s602 = scalar_lea.sflag [#allocation7], 1
    %603 = vsyncpa %s602, 1

</llo_original>
